<compile_context>
chip_gen: v7x
topology: tpu7x:2x2x1
jax: 0.10.0
libtpu: 0.0.40
codegen_flags: <defaults>
</compile_context>

<pallas_src>
import jax
import jax.numpy as jnp
import numpy as np
from jax.experimental import pallas as pl
from jax.experimental.pallas import tpu as pltpu


def _gather_bias_kernel(inds_ref, tbl_ref, out_ref):
    # inds_ref: (1, TILE_NN)     int32   flattened (clamped) embedding indices
    # tbl_ref : (H_PAD, V)       float32 embedding weight, transposed + padded
    # out_ref : (H_PAD, TILE_NN) float32 lane-dense bias tile
    inds = inds_ref[...]                                   # (1, T)
    tbl = tbl_ref[...]                                     # (H_PAD, V)
    V = tbl.shape[1]
    T = inds.shape[1]

    # Per-tile one-hot gather realized as an MXU matmul:
    #   (H_PAD, V) @ (V, T) -> (H_PAD, T).  The one-hot only exists for the
    # current tile (V * TILE_NN * 4 bytes ~= 2 MiB at TILE_NN = 32768).
    iota_v = jax.lax.broadcasted_iota(jnp.int32, (V, T), 0)
    onehot = (iota_v == inds).astype(jnp.float32)          # compare -> cast
    # HIGHEST precision keeps the f32 table entries bit-exact through the MXU
    # (each output is exactly one table entry; any bf16 truncation would break
    # equality with the embedding lookup).
    out_ref[...] = jnp.dot(
        tbl, onehot,
        preferred_element_type=jnp.float32,
        precision=jax.lax.Precision.HIGHEST,
    )


def graph_attn_bias(spatial_pos, x, emb_weight, num_spatial):
    """Pallas implementation of GraphAttnBias.forward.

    spatial_pos: (Ns, Ns) float32, values in [0, 1]
    x          : (B, num_nodes, D) -- only shapes are used
    emb_weight : (num_spatial + 1, num_heads) float32 embedding table
    returns    : (B, num_heads, num_nodes, num_nodes) float32
    """
    B, num_nodes = x.shape[0], x.shape[1]
    V, H = emb_weight.shape
    Ns = spatial_pos.shape[1]

    # torch.floor(spatial_pos / (1 / num_spatial)).long() -- same explicit
    # f32 divide as the reference.  Clamp guards the silent-zero behavior of
    # the one-hot gather (torch's Embedding would raise for OOB indices).
    inv_step = jnp.float32(1.0 / num_spatial)
    inds = jnp.floor(spatial_pos.astype(jnp.float32) / inv_step).astype(jnp.int32)
    inds = jnp.clip(inds, 0, V - 1)

    if num_nodes == Ns + 1:
        # Padding branch: torch prepends a row and a column filled with
        # embedding weight[-1] (index num_spatial == V-1).
        inds = jnp.pad(inds, ((1, 0), (1, 0)), constant_values=V - 1)
    N = inds.shape[0]
    nn = N * N

    # --- Tiling of the flattened N*N axis -----------------------------------
    # Big lane-dense tiles (up to 32768 lanes) to amortize the ~0.35 us
    # per-grid-step overhead and get long unmasked output DMAs, but keep
    # >= 2 tiles whenever possible so the parallel axis shards across the two
    # v7x TensorCores.  Tiles are load-balanced (minimal lane padding).
    LANE = 128
    MAX_TILE = 32768
    nn_lanes = pl.cdiv(nn, LANE)
    num_tiles = max(pl.cdiv(nn_lanes * LANE, MAX_TILE), 2 if nn_lanes >= 2 else 1)
    tile_nn = pl.cdiv(nn_lanes, num_tiles) * LANE
    nn_pad = num_tiles * tile_nn

    # Flattened, lane-padded index row.  Padding indices are 0 (valid); the
    # corresponding bias columns are sliced off after the kernel.
    inds_flat = jnp.zeros((1, nn_pad), jnp.int32).at[0, :nn].set(inds.reshape(-1))

    # Transposed table padded to 8 sublanes so output vregs / pops / stores
    # run at full sublane width.  Extra rows are zero and sliced off below.
    H_PAD = max(8, pl.cdiv(H, 8) * 8)
    tbl_t = jnp.zeros((H_PAD, V), jnp.float32).at[:H, :].set(
        emb_weight.T.astype(jnp.float32))

    cost = pl.CostEstimate(
        flops=2 * H_PAD * V * nn_pad,
        transcendentals=0,
        bytes_accessed=4 * (nn_pad + H_PAD * V + H_PAD * nn_pad),
    )

    bias_flat = pl.pallas_call(
        _gather_bias_kernel,
        out_shape=jax.ShapeDtypeStruct((H_PAD, nn_pad), jnp.float32),
        grid=(num_tiles,),
        in_specs=[
            pl.BlockSpec((1, tile_nn), lambda t: (0, t)),
            pl.BlockSpec((H_PAD, V), lambda t: (0, 0)),
        ],
        out_specs=pl.BlockSpec((H_PAD, tile_nn), lambda t: (0, t)),
        compiler_params=pltpu.CompilerParams(
            dimension_semantics=("parallel",),
            vmem_limit_bytes=32 << 20,
        ),
        cost_estimate=cost,
    )(inds_flat, tbl_t)

    # Slice away the sublane / lane padding, reshape to (H, N, N) and broadcast
    # over batch in the wrapper.  The broadcast stays implicit when the
    # consumer fuses the bias-add; the per-batch bias is identical so the
    # kernel itself never recomputes it per batch element.
    bias = bias_flat[:H, :nn].reshape(H, N, N)
    return jnp.broadcast_to(bias[None], (B, H, N, N))


def graph_attn_bias_ref(spatial_pos, x, emb_weight, num_spatial):
    """Pure-JAX reference mirroring the PyTorch module."""
    B, num_nodes = x.shape[0], x.shape[1]
    V, H = emb_weight.shape
    inds = jnp.floor(
        spatial_pos.astype(jnp.float32) / jnp.float32(1.0 / num_spatial)
    ).astype(jnp.int32)
    bias = emb_weight[inds]                       # (Ns, Ns, H)
    bias = jnp.transpose(bias, (2, 0, 1))         # (H, Ns, Ns)
    bias = jnp.broadcast_to(bias[None], (B,) + bias.shape)
    if num_nodes == spatial_pos.shape[1] + 1:
        pad = emb_weight[-1]                      # (H,)
        pad_row = jnp.broadcast_to(pad[None, :, None, None],
                                   (B, H, 1, num_nodes - 1))
        bias = jnp.concatenate([pad_row, bias], axis=2)
        pad_col = jnp.broadcast_to(pad[None, :, None, None],
                                   (B, H, num_nodes, 1))
        bias = jnp.concatenate([pad_col, bias], axis=3)
    return bias


if __name__ == "__main__":
    num_heads = 4
    num_spatial = 16
    n_layers = 2  # only affects nn.Linear init in torch; no Linear here

    batch = 2
    num_nodes = 8
    hidden = 32

    key = jax.random.PRNGKey(0)
    k_emb, k_sp, k_x = jax.random.split(key, 3)

    # nn.Embedding(num_spatial+1, num_heads) re-initialized by init_params:
    # normal(mean=0, std=0.02) over the whole table (padding row included,
    # since init_params overwrites it after construction).
    emb_weight = (0.02 * jax.random.normal(
        k_emb, (num_spatial + 1, num_heads), dtype=jnp.float32))

    # spatial_pos: (num_nodes-1, num_nodes-1) in [0, 1) -> exercises the
    # x.shape[1] == spatial_pos.shape[1] + 1 padding branch.
    spatial_pos = jax.random.uniform(
        k_sp, (num_nodes - 1, num_nodes - 1), dtype=jnp.float32)
    x = jax.random.normal(k_x, (batch, num_nodes, hidden), dtype=jnp.float32)

    out = graph_attn_bias(spatial_pos, x, emb_weight, num_spatial)
    out = jax.block_until_ready(out)

    ref = graph_attn_bias_ref(spatial_pos, x, emb_weight, num_spatial)
    assert out.shape == (batch, num_heads, num_nodes, num_nodes), out.shape
    assert out.dtype == jnp.float32
    np.testing.assert_allclose(np.asarray(out), np.asarray(ref),
                               rtol=1e-6, atol=1e-6)

    # Also check the non-padding branch (x.shape[1] == spatial_pos.shape[1]).
    sp_full = jax.random.uniform(k_sp, (num_nodes, num_nodes),
                                 dtype=jnp.float32)
    out2 = jax.block_until_ready(
        graph_attn_bias(sp_full, x, emb_weight, num_spatial))
    ref2 = graph_attn_bias_ref(sp_full, x, emb_weight, num_spatial)
    np.testing.assert_allclose(np.asarray(out2), np.asarray(ref2),
                               rtol=1e-6, atol=1e-6)

    # A larger graph to exercise the multi-tile (>= 2 tiles) path.
    n_big = 64
    sp_big = jax.random.uniform(k_sp, (n_big, n_big), dtype=jnp.float32)
    x_big = jnp.zeros((batch, n_big, hidden), jnp.float32)
    out3 = jax.block_until_ready(
        graph_attn_bias(sp_big, x_big, emb_weight, num_spatial))
    ref3 = graph_attn_bias_ref(sp_big, x_big, emb_weight, num_spatial)
    np.testing.assert_allclose(np.asarray(out3), np.asarray(ref3),
                               rtol=1e-6, atol=1e-6)

    print("KERNEL_OK")
</pallas_src>

<mosaic_0001>
module attributes {stable_mosaic.version = 11 : i64} {
  func.func @_gather_bias_kernel(%arg0: i32, %arg1: memref<1x128xi32, #tpu.memory_space<vmem>>, %arg2: memref<8x17xf32, #tpu.memory_space<vmem>>, %arg3: memref<8x128xf32, #tpu.memory_space<vmem>>) attributes {dimension_semantics = [#tpu.dimension_semantics<parallel>], iteration_bounds = array<i64: 1>, scalar_prefetch = 0 : i64, scratch_operands = 0 : i64, tpu.core_type = #tpu.core_type<tc>, window_params = [{transform_indices = @transform_0, window_bounds = array<i64: 1, 128>}, {pipeline_mode = #tpu.pipeline_mode<synchronous>, transform_indices = @transform_1, window_bounds = array<i64: 8, 17>}, {transform_indices = @transform_2, window_bounds = array<i64: 8, 128>}]} {
    %c0 = arith.constant 0 : index
    %c0_0 = arith.constant 0 : index
    %0 = vector.load %arg1[%c0, %c0_0] : memref<1x128xi32, #tpu.memory_space<vmem>>, vector<1x128xi32>
    %c0_1 = arith.constant 0 : index
    %c0_2 = arith.constant 0 : index
    %1 = vector.load %arg2[%c0_1, %c0_2] : memref<8x17xf32, #tpu.memory_space<vmem>>, vector<8x17xf32>
    %2 = tpu.iota {dimensions = array<i32: 0>} : vector<17x128xi32>
    %3 = vector.broadcast %0 : vector<1x128xi32> to vector<17x128xi32>
    %4 = arith.cmpi eq, %2, %3 : vector<17x128xi32>
    %5 = arith.extui %4 : vector<17x128xi1> to vector<17x128xi32>
    %6 = arith.sitofp %5 : vector<17x128xi32> to vector<17x128xf32>
    %cst = arith.constant dense<0.000000e+00> : vector<8x128xf32>
    %7 = tpu.matmul %1, %6, %cst {dimension_numbers = #tpu.dot_dimension_numbers<[1], [0], [0], [1], [0, 0, 1, 1], [], []>, precision = #tpu.contract_precision<fp32>} : vector<8x17xf32>, vector<17x128xf32>, vector<8x128xf32> -> vector<8x128xf32>
    %c0_3 = arith.constant 0 : index
    %c0_4 = arith.constant 0 : index
    %8 = vector.load %arg3[%c0_3, %c0_4] : memref<8x128xf32, #tpu.memory_space<vmem>>, vector<8x128xf32>
    tpu.vector_store %arg3[%c0_3, %c0_4], %7 {strides = array<i32>} : memref<8x128xf32, #tpu.memory_space<vmem>>, vector<8x128xf32>,
    return
  }
  func.func @transform_0(%arg0: i32) -> (i32, i32) {
    %c0_i32 = arith.constant 0 : i32
    %c0_i32_0 = arith.constant 0 : i32
    return %c0_i32, %arg0 : i32, i32
  }
  func.func @transform_1(%arg0: i32) -> (i32, i32) {
    %c0_i32 = arith.constant 0 : i32
    %c0_i32_0 = arith.constant 0 : i32
    %c0_i32_1 = arith.constant 0 : i32
    return %c0_i32, %c0_i32_0 : i32, i32
  }
  func.func @transform_2(%arg0: i32) -> (i32, i32) {
    %c0_i32 = arith.constant 0 : i32
    %c0_i32_0 = arith.constant 0 : i32
    return %c0_i32, %arg0 : i32, i32
  }
}

</mosaic_0001>

<llo_original>
// kernel: tpu_custom_call.1
$region0: #{tpu_custom_call.1}
  #allocation0 [shape = 'u32[]', space=smem, size = 0x4, offset = 0x4, fixed_abs, tag = 'smem constant byte address 0x4 - core index']
  #allocation1 [shape = 'u32[144,128]{1,0:T(1,128)}', space=vmem, size = 0x12000, scoped, tag = 'internal scratch']
  %s0 = inlined_call_operand.hbm [shape: s32[1,128], index: 0, kind: input, shape index: {}]
  %s1 = inlined_call_operand.hbm [shape: f32[8,17], index: 1, kind: input, shape index: {}]
  %s2 = inlined_call_operand.hbm [shape: f32[8,128], index: 2, kind: output, shape index: {}]
  %s3 = sld [smem:[#allocation0]]
  $region26: #{tpu_custom_call.1} parent=0
    _
  %s5 = ssub.s32 1, %s3
  %s6 = scalar_select 0, %s5, %s3
  $region1: #{tpu_custom_call.1} parent=0
    #allocation2 [shape = 'u8[512]{0}', space=vmem, size = 0x400, scoped, tag = 'input window, operand 0, single buffered']
    #allocation3 [shape = 's32[1]{0}', space=sflag, size = 0x4, scoped, tag = 'scoped memory for tpu_custom_call.1']
    #allocation4 [shape = 's32[1]{0}', space=sflag, size = 0x4, scoped, tag = 'scoped memory for tpu_custom_call.1']
    #allocation5 [shape = 'u8[4096]{0}', space=vmem, size = 0x1000, scoped, tag = 'input window, operand 1, single buffered']
    #allocation6 [shape = 's32[1]{0}', space=sflag, size = 0x4, scoped, tag = 'scoped memory for tpu_custom_call.1']
    #allocation7 [shape = 'u8[4096]{0}', space=vmem, size = 0x1000, scoped, tag = 'output window, operand 0, single buffered']
    %7 = vsyncpa [#allocation3], 0
    %8 = vsyncpa [#allocation6], 0
    %9 = vsyncpa [#allocation4], 0
    // Predicated region
    $region2: #{tpu_custom_call.1} parent=1 // pred_check
      _
    $region3: #{tpu_custom_call.1} parent=1 // pred_check_branch
      %11 = sbr.rel (0) target = $region5
    $region4: #{tpu_custom_call.1} parent=1 // pred_region
      %s13 = ssub.s32 16, 16
      %14 = vsyncadd [#allocation3], %s13
      %s16 = sshll.u32 [#allocation2], 4
      %s17 = int_to_ptr.vmem [resolvable:$true] %s16
      %19 = dma.hbm_to_vmem [thread:$0]  %s0, 16, %s17, [#allocation3]
    $region5: #{tpu_custom_call.1} parent=1 // pred_fallthru
      _
    // Predicated region
    $region6: #{tpu_custom_call.1} parent=1 // pred_check
      _
    $region7: #{tpu_custom_call.1} parent=1 // pred_check_branch
      %21 = sbr.rel (0) target = $region9
    $region8: #{tpu_custom_call.1} parent=1 // pred_region
      %s23 = ssub.s32 128, 128
      %24 = vsyncadd [#allocation6], %s23
      %s26 = sshll.u32 [#allocation5], 4
      %s27 = int_to_ptr.vmem [resolvable:$true] %s26
      %29 = dma.hbm_to_vmem [thread:$0]  %s1, 128, %s27, [#allocation6]
    $region9: #{tpu_custom_call.1} parent=1 // pred_fallthru
      _
    // Predicated region
    $region10: #{tpu_custom_call.1} parent=1 // pred_check
      _
    $region11: #{tpu_custom_call.1} parent=1 // pred_check_branch
      %31 = sbr.rel (0) target = $region13
    $region12: #{tpu_custom_call.1} parent=1 // pred_region
      %32 = dma.done [#allocation3], 16
    $region13: #{tpu_custom_call.1} parent=1 // pred_fallthru
      _
    // Predicated region
    $region14: #{tpu_custom_call.1} parent=1 // pred_check
      _
    $region15: #{tpu_custom_call.1} parent=1 // pred_check_branch
      %34 = sbr.rel (0) target = $region17
    $region16: #{tpu_custom_call.1} parent=1 // pred_region
      %35 = dma.done [#allocation6], 128
    $region17: #{tpu_custom_call.1} parent=1 // pred_fallthru
      _
    %v36 = vld [vmem:[#allocation2] sm:$0x1]
    %v37 = vld [vmem:[#allocation5] sm:$0xff]
    %v38 = vlaneseq
    %v39 = vshrl.u32 %v38, 7
    %v40 = vadd.s32 %v39, 8
    %v41 = vadd.s32 %v39, 16
    %v42 = vlaneseq
    %v43 = vshrl.u32 %v42, 7
    %v44 = vsub.s32 0, %v43
    %v45 = vrot.slane %v36, %v44
    %vm46 = vcmp.eq.s32.totalorder %v39, %v45
    %vm47 = vcmp.eq.s32.totalorder %v40, %v45
    %vm48 = vcmp.eq.s32.totalorder %v41, %v45
    %v49 = vsel %vm46, 1, 0
    %v50 = vsel %vm47, 1, 0
    %v51 = vsel %vm48, 1, 0
    %v52 = vcvt.s32.f32 %v49
    %v53 = vcvt.s32.f32 %v50
    %v54 = vcvt.s32.f32 %v51
    %vm55 = vcmask 138240
    %v57 = vsel %vm55, %v37, 0
    %vm59 = vcmask 1040384
    %v61 = vsel %vm59, %v54, 0
    %63 = vmatprep.subr.mxu0 0.0
    %v64 = vand.u32 %v52, 4294901760
    %65 = vmatpush1.msra.mxu0 %v64
    %66 = vmatprep.subr.mxu0 0.0
    %v67 = vand.u32 %v53, 4294901760
    %68 = vmatpush1.msra.mxu0 %v67
    %69 = vmatprep.subr.mxu0 0.0
    %v70 = vand.u32 %v61, 4294901760
    %71 = vmatpush1.msra.mxu0 %v70
    %72 = vmatprep.subr.mxu0 0.0
    %73 = vmatpush1.msra.mxu0 0.0
    %74 = vmatprep.subr.mxu0 0.0
    %75 = vmatpush1.msra.mxu0 0.0
    %76 = vmatprep.subr.mxu0 0.0
    %77 = vmatpush1.msra.mxu0 0.0
    %78 = vmatprep.subr.mxu0 0.0
    %79 = vmatpush1.msra.mxu0 0.0
    %80 = vmatprep.subr.mxu0 0.0
    %81 = vmatpush1.msra.mxu0 0.0
    %82 = vmatprep.subr.mxu0 0.0
    %83 = vmatpush1.msra.mxu0 0.0
    %84 = vmatprep.subr.mxu0 0.0
    %85 = vmatpush1.msra.mxu0 0.0
    %86 = vmatprep.subr.mxu0 0.0
    %87 = vmatpush1.msra.mxu0 0.0
    %88 = vmatprep.subr.mxu0 0.0
    %89 = vmatpush1.msra.mxu0 0.0
    %90 = vmatprep.subr.mxu0 0.0
    %91 = vmatpush1.msra.mxu0 0.0
    %92 = vmatprep.subr.mxu0 0.0
    %93 = vmatpush1.msra.mxu0 0.0
    %94 = vmatprep.subr.mxu0 0.0
    %95 = vmatpush1.msra.mxu0 0.0
    %96 = vmatprep.subr.mxu0 0.0
    %97 = vmatpush1.msra.mxu0 0.0
    %98 = vmatprep.subr.mxu0 0.0
    %99 = vmatpush1.msra.mxu0 0.0
    %100 = vmatprep.subr.mxu0 0.0
    %101 = vmatpush1.msra.mxu0 0.0
    %102 = vmatprep.subr.mxu0 0.0
    %103 = vmatpush1.msra.mxu0 0.0
    %104 = vmatprep.subr.mxu0 0.0
    %105 = vmatpush1.msra.mxu0 0.0
    %106 = vmatprep.subr.mxu0 0.0
    %107 = vmatpush1.msra.mxu0 0.0
    %108 = vmatprep.subr.mxu0 0.0
    %109 = vmatpush1.msra.mxu0 0.0
    %110 = vmatprep.subr.mxu0 0.0
    %111 = vmatpush1.msra.mxu0 0.0
    %112 = vmatprep.subr.mxu0 0.0
    %113 = vmatpush1.msra.mxu0 0.0
    %114 = vmatprep.subr.mxu0 0.0
    %115 = vmatpush1.msra.mxu0 0.0
    %116 = vmatprep.subr.mxu0 0.0
    %117 = vmatpush1.msra.mxu0 0.0
    %118 = vmatprep.subr.mxu0 0.0
    %119 = vmatpush1.msra.mxu0 0.0
    %120 = vmatprep.subr.mxu0 0.0
    %121 = vmatpush1.msra.mxu0 0.0
    %122 = vmatprep.subr.mxu0 0.0
    %123 = vmatpush1.msra.mxu0 0.0
    %124 = vmatprep.subr.mxu0 0.0
    %125 = vmatpush1.msra.mxu0 0.0
    %126 = vmatprep.subr.mxu0 0.0
    %127 = vmatpush1.msra.mxu0 0.0
    %128 = vmatprep.subr.mxu0 0.0
    %129 = vmatpush1.msra.mxu0 0.0
    %130 = vmatprep.mubr.f32.mxu0 0.0
    %v131 = vand.u32 %v57, 4294901760
    %v132 = vsub.f32 %v57, %v131
    %v133 = vand.u32 %v132, 4294901760
    %v134 = vsub.f32 %v132, %v133
    %v135 = vand.u32 %v134, 4294901760
    %136 = vmatmul.mubr.f32.gmra.mrb[0].mxu0 %v135
    %v137 = vpop.f32.mrb[0].mxu0
    %v138 = vadd.f32 0.0, %v137
    %v139 = vpop.f32.mrb[0].mxu0
    %140 = vdwg.mxu0
    %141 = vmatprep.subr.mxu0 0.0
    %v142 = vand.u32 %v52, 4294901760
    %v143 = vsub.f32 %v52, %v142
    %v144 = vand.u32 %v143, 4294901760
    %v145 = vsub.f32 %v143, %v144
    %v146 = vand.u32 %v145, 4294901760
    %147 = vmatpush1.msra.mxu0 %v146
    %148 = vmatprep.subr.mxu0 0.0
    %v149 = vand.u32 %v53, 4294901760
    %v150 = vsub.f32 %v53, %v149
    %v151 = vand.u32 %v150, 4294901760
    %v152 = vsub.f32 %v150, %v151
    %v153 = vand.u32 %v152, 4294901760
    %154 = vmatpush1.msra.mxu0 %v153
    %155 = vmatprep.subr.mxu0 0.0
    %v156 = vand.u32 %v61, 4294901760
    %v157 = vsub.f32 %v61, %v156
    %v158 = vand.u32 %v157, 4294901760
    %v159 = vsub.f32 %v157, %v158
    %v160 = vand.u32 %v159, 4294901760
    %161 = vmatpush1.msra.mxu0 %v160
    %162 = vmatprep.subr.mxu0 0.0
    %163 = vmatpush1.msra.mxu0 0.0
    %164 = vmatprep.subr.mxu0 0.0
    %165 = vmatpush1.msra.mxu0 0.0
    %166 = vmatprep.subr.mxu0 0.0
    %167 = vmatpush1.msra.mxu0 0.0
    %168 = vmatprep.subr.mxu0 0.0
    %169 = vmatpush1.msra.mxu0 0.0
    %170 = vmatprep.subr.mxu0 0.0
    %171 = vmatpush1.msra.mxu0 0.0
    %172 = vmatprep.subr.mxu0 0.0
    %173 = vmatpush1.msra.mxu0 0.0
    %174 = vmatprep.subr.mxu0 0.0
    %175 = vmatpush1.msra.mxu0 0.0
    %176 = vmatprep.subr.mxu0 0.0
    %177 = vmatpush1.msra.mxu0 0.0
    %178 = vmatprep.subr.mxu0 0.0
    %179 = vmatpush1.msra.mxu0 0.0
    %180 = vmatprep.subr.mxu0 0.0
    %181 = vmatpush1.msra.mxu0 0.0
    %182 = vmatprep.subr.mxu0 0.0
    %183 = vmatpush1.msra.mxu0 0.0
    %184 = vmatprep.subr.mxu0 0.0
    %185 = vmatpush1.msra.mxu0 0.0
    %186 = vmatprep.subr.mxu0 0.0
    %187 = vmatpush1.msra.mxu0 0.0
    %188 = vmatprep.subr.mxu0 0.0
    %189 = vmatpush1.msra.mxu0 0.0
    %190 = vmatprep.subr.mxu0 0.0
    %191 = vmatpush1.msra.mxu0 0.0
    %192 = vmatprep.subr.mxu0 0.0
    %193 = vmatpush1.msra.mxu0 0.0
    %194 = vmatprep.subr.mxu0 0.0
    %195 = vmatpush1.msra.mxu0 0.0
    %196 = vmatprep.subr.mxu0 0.0
    %197 = vmatpush1.msra.mxu0 0.0
    %198 = vmatprep.subr.mxu0 0.0
    %199 = vmatpush1.msra.mxu0 0.0
    %200 = vmatprep.subr.mxu0 0.0
    %201 = vmatpush1.msra.mxu0 0.0
    %202 = vmatprep.subr.mxu0 0.0
    %203 = vmatpush1.msra.mxu0 0.0
    %204 = vmatprep.subr.mxu0 0.0
    %205 = vmatpush1.msra.mxu0 0.0
    %206 = vmatprep.subr.mxu0 0.0
    %207 = vmatpush1.msra.mxu0 0.0
    %208 = vmatprep.subr.mxu0 0.0
    %209 = vmatpush1.msra.mxu0 0.0
    %210 = vmatprep.subr.mxu0 0.0
    %211 = vmatpush1.msra.mxu0 0.0
    %212 = vmatprep.subr.mxu0 0.0
    %213 = vmatpush1.msra.mxu0 0.0
    %214 = vmatprep.subr.mxu0 0.0
    %215 = vmatpush1.msra.mxu0 0.0
    %216 = vmatprep.subr.mxu0 0.0
    %217 = vmatpush1.msra.mxu0 0.0
    %218 = vmatprep.subr.mxu0 0.0
    %219 = vmatpush1.msra.mxu0 0.0
    %220 = vmatprep.mubr.f32.mxu0 0.0
    %v221 = vand.u32 %v57, 4294901760
    %222 = vmatmul.mubr.f32.gmra.mrb[0].mxu0 %v221
    %v223 = vpop.f32.mrb[0].mxu0
    %v224 = vadd.f32 %v138, %v223
    %v225 = vpop.f32.mrb[0].mxu0
    %226 = vdwg.mxu0
    %227 = vmatprep.subr.mxu0 0.0
    %v228 = vand.u32 %v52, 4294901760
    %v229 = vsub.f32 %v52, %v228
    %230 = vmatpush1.msra.mxu0 %v229
    %231 = vmatprep.subr.mxu0 0.0
    %v232 = vand.u32 %v53, 4294901760
    %v233 = vsub.f32 %v53, %v232
    %234 = vmatpush1.msra.mxu0 %v233
    %235 = vmatprep.subr.mxu0 0.0
    %v236 = vand.u32 %v61, 4294901760
    %v237 = vsub.f32 %v61, %v236
    %238 = vmatpush1.msra.mxu0 %v237
    %239 = vmatprep.subr.mxu0 0.0
    %240 = vmatpush1.msra.mxu0 0.0
    %241 = vmatprep.subr.mxu0 0.0
    %242 = vmatpush1.msra.mxu0 0.0
    %243 = vmatprep.subr.mxu0 0.0
    %244 = vmatpush1.msra.mxu0 0.0
    %245 = vmatprep.subr.mxu0 0.0
    %246 = vmatpush1.msra.mxu0 0.0
    %247 = vmatprep.subr.mxu0 0.0
    %248 = vmatpush1.msra.mxu0 0.0
    %249 = vmatprep.subr.mxu0 0.0
    %250 = vmatpush1.msra.mxu0 0.0
    %251 = vmatprep.subr.mxu0 0.0
    %252 = vmatpush1.msra.mxu0 0.0
    %253 = vmatprep.subr.mxu0 0.0
    %254 = vmatpush1.msra.mxu0 0.0
    %255 = vmatprep.subr.mxu0 0.0
    %256 = vmatpush1.msra.mxu0 0.0
    %257 = vmatprep.subr.mxu0 0.0
    %258 = vmatpush1.msra.mxu0 0.0
    %259 = vmatprep.subr.mxu0 0.0
    %260 = vmatpush1.msra.mxu0 0.0
    %261 = vmatprep.subr.mxu0 0.0
    %262 = vmatpush1.msra.mxu0 0.0
    %263 = vmatprep.subr.mxu0 0.0
    %264 = vmatpush1.msra.mxu0 0.0
    %265 = vmatprep.subr.mxu0 0.0
    %266 = vmatpush1.msra.mxu0 0.0
    %267 = vmatprep.subr.mxu0 0.0
    %268 = vmatpush1.msra.mxu0 0.0
    %269 = vmatprep.subr.mxu0 0.0
    %270 = vmatpush1.msra.mxu0 0.0
    %271 = vmatprep.subr.mxu0 0.0
    %272 = vmatpush1.msra.mxu0 0.0
    %273 = vmatprep.subr.mxu0 0.0
    %274 = vmatpush1.msra.mxu0 0.0
    %275 = vmatprep.subr.mxu0 0.0
    %276 = vmatpush1.msra.mxu0 0.0
    %277 = vmatprep.subr.mxu0 0.0
    %278 = vmatpush1.msra.mxu0 0.0
    %279 = vmatprep.subr.mxu0 0.0
    %280 = vmatpush1.msra.mxu0 0.0
    %281 = vmatprep.subr.mxu0 0.0
    %282 = vmatpush1.msra.mxu0 0.0
    %283 = vmatprep.subr.mxu0 0.0
    %284 = vmatpush1.msra.mxu0 0.0
    %285 = vmatprep.subr.mxu0 0.0
    %286 = vmatpush1.msra.mxu0 0.0
    %287 = vmatprep.subr.mxu0 0.0
    %288 = vmatpush1.msra.mxu0 0.0
    %289 = vmatprep.subr.mxu0 0.0
    %290 = vmatpush1.msra.mxu0 0.0
    %291 = vmatprep.subr.mxu0 0.0
    %292 = vmatpush1.msra.mxu0 0.0
    %293 = vmatprep.subr.mxu0 0.0
    %294 = vmatpush1.msra.mxu0 0.0
    %295 = vmatprep.subr.mxu0 0.0
    %296 = vmatpush1.msra.mxu0 0.0
    %297 = vmatprep.mubr.f32.mxu0 0.0
    %v298 = vand.u32 %v57, 4294901760
    %v299 = vsub.f32 %v57, %v298
    %300 = vmatmul.mubr.f32.gmra.mrb[0].mxu0 %v299
    %v301 = vpop.f32.mrb[0].mxu0
    %v302 = vadd.f32 %v224, %v301
    %v303 = vpop.f32.mrb[0].mxu0
    %304 = vdwg.mxu0
    %305 = vmatprep.subr.mxu0 0.0
    %v306 = vand.u32 %v52, 4294901760
    %307 = vmatpush1.msra.mxu0 %v306
    %308 = vmatprep.subr.mxu0 0.0
    %v309 = vand.u32 %v53, 4294901760
    %310 = vmatpush1.msra.mxu0 %v309
    %311 = vmatprep.subr.mxu0 0.0
    %v312 = vand.u32 %v61, 4294901760
    %313 = vmatpush1.msra.mxu0 %v312
    %314 = vmatprep.subr.mxu0 0.0
    %315 = vmatpush1.msra.mxu0 0.0
    %316 = vmatprep.subr.mxu0 0.0
    %317 = vmatpush1.msra.mxu0 0.0
    %318 = vmatprep.subr.mxu0 0.0
    %319 = vmatpush1.msra.mxu0 0.0
    %320 = vmatprep.subr.mxu0 0.0
    %321 = vmatpush1.msra.mxu0 0.0
    %322 = vmatprep.subr.mxu0 0.0
    %323 = vmatpush1.msra.mxu0 0.0
    %324 = vmatprep.subr.mxu0 0.0
    %325 = vmatpush1.msra.mxu0 0.0
    %326 = vmatprep.subr.mxu0 0.0
    %327 = vmatpush1.msra.mxu0 0.0
    %328 = vmatprep.subr.mxu0 0.0
    %329 = vmatpush1.msra.mxu0 0.0
    %330 = vmatprep.subr.mxu0 0.0
    %331 = vmatpush1.msra.mxu0 0.0
    %332 = vmatprep.subr.mxu0 0.0
    %333 = vmatpush1.msra.mxu0 0.0
    %334 = vmatprep.subr.mxu0 0.0
    %335 = vmatpush1.msra.mxu0 0.0
    %336 = vmatprep.subr.mxu0 0.0
    %337 = vmatpush1.msra.mxu0 0.0
    %338 = vmatprep.subr.mxu0 0.0
    %339 = vmatpush1.msra.mxu0 0.0
    %340 = vmatprep.subr.mxu0 0.0
    %341 = vmatpush1.msra.mxu0 0.0
    %342 = vmatprep.subr.mxu0 0.0
    %343 = vmatpush1.msra.mxu0 0.0
    %344 = vmatprep.subr.mxu0 0.0
    %345 = vmatpush1.msra.mxu0 0.0
    %346 = vmatprep.subr.mxu0 0.0
    %347 = vmatpush1.msra.mxu0 0.0
    %348 = vmatprep.subr.mxu0 0.0
    %349 = vmatpush1.msra.mxu0 0.0
    %350 = vmatprep.subr.mxu0 0.0
    %351 = vmatpush1.msra.mxu0 0.0
    %352 = vmatprep.subr.mxu0 0.0
    %353 = vmatpush1.msra.mxu0 0.0
    %354 = vmatprep.subr.mxu0 0.0
    %355 = vmatpush1.msra.mxu0 0.0
    %356 = vmatprep.subr.mxu0 0.0
    %357 = vmatpush1.msra.mxu0 0.0
    %358 = vmatprep.subr.mxu0 0.0
    %359 = vmatpush1.msra.mxu0 0.0
    %360 = vmatprep.subr.mxu0 0.0
    %361 = vmatpush1.msra.mxu0 0.0
    %362 = vmatprep.subr.mxu0 0.0
    %363 = vmatpush1.msra.mxu0 0.0
    %364 = vmatprep.subr.mxu0 0.0
    %365 = vmatpush1.msra.mxu0 0.0
    %366 = vmatprep.subr.mxu0 0.0
    %367 = vmatpush1.msra.mxu0 0.0
    %368 = vmatprep.subr.mxu0 0.0
    %369 = vmatpush1.msra.mxu0 0.0
    %370 = vmatprep.subr.mxu0 0.0
    %371 = vmatpush1.msra.mxu0 0.0
    %372 = vmatprep.mubr.f32.mxu0 0.0
    %v373 = vand.u32 %v57, 4294901760
    %v374 = vsub.f32 %v57, %v373
    %v375 = vand.u32 %v374, 4294901760
    %376 = vmatmul.mubr.f32.gmra.mrb[0].mxu0 %v375
    %v377 = vpop.f32.mrb[0].mxu0
    %v378 = vadd.f32 %v302, %v377
    %v379 = vpop.f32.mrb[0].mxu0
    %380 = vdwg.mxu0
    %381 = vmatprep.subr.mxu0 0.0
    %v382 = vand.u32 %v52, 4294901760
    %v383 = vsub.f32 %v52, %v382
    %v384 = vand.u32 %v383, 4294901760
    %385 = vmatpush1.msra.mxu0 %v384
    %386 = vmatprep.subr.mxu0 0.0
    %v387 = vand.u32 %v53, 4294901760
    %v388 = vsub.f32 %v53, %v387
    %v389 = vand.u32 %v388, 4294901760
    %390 = vmatpush1.msra.mxu0 %v389
    %391 = vmatprep.subr.mxu0 0.0
    %v392 = vand.u32 %v61, 4294901760
    %v393 = vsub.f32 %v61, %v392
    %v394 = vand.u32 %v393, 4294901760
    %395 = vmatpush1.msra.mxu0 %v394
    %396 = vmatprep.subr.mxu0 0.0
    %397 = vmatpush1.msra.mxu0 0.0
    %398 = vmatprep.subr.mxu0 0.0
    %399 = vmatpush1.msra.mxu0 0.0
    %400 = vmatprep.subr.mxu0 0.0
    %401 = vmatpush1.msra.mxu0 0.0
    %402 = vmatprep.subr.mxu0 0.0
    %403 = vmatpush1.msra.mxu0 0.0
    %404 = vmatprep.subr.mxu0 0.0
    %405 = vmatpush1.msra.mxu0 0.0
    %406 = vmatprep.subr.mxu0 0.0
    %407 = vmatpush1.msra.mxu0 0.0
    %408 = vmatprep.subr.mxu0 0.0
    %409 = vmatpush1.msra.mxu0 0.0
    %410 = vmatprep.subr.mxu0 0.0
    %411 = vmatpush1.msra.mxu0 0.0
    %412 = vmatprep.subr.mxu0 0.0
    %413 = vmatpush1.msra.mxu0 0.0
    %414 = vmatprep.subr.mxu0 0.0
    %415 = vmatpush1.msra.mxu0 0.0
    %416 = vmatprep.subr.mxu0 0.0
    %417 = vmatpush1.msra.mxu0 0.0
    %418 = vmatprep.subr.mxu0 0.0
    %419 = vmatpush1.msra.mxu0 0.0
    %420 = vmatprep.subr.mxu0 0.0
    %421 = vmatpush1.msra.mxu0 0.0
    %422 = vmatprep.subr.mxu0 0.0
    %423 = vmatpush1.msra.mxu0 0.0
    %424 = vmatprep.subr.mxu0 0.0
    %425 = vmatpush1.msra.mxu0 0.0
    %426 = vmatprep.subr.mxu0 0.0
    %427 = vmatpush1.msra.mxu0 0.0
    %428 = vmatprep.subr.mxu0 0.0
    %429 = vmatpush1.msra.mxu0 0.0
    %430 = vmatprep.subr.mxu0 0.0
    %431 = vmatpush1.msra.mxu0 0.0
    %432 = vmatprep.subr.mxu0 0.0
    %433 = vmatpush1.msra.mxu0 0.0
    %434 = vmatprep.subr.mxu0 0.0
    %435 = vmatpush1.msra.mxu0 0.0
    %436 = vmatprep.subr.mxu0 0.0
    %437 = vmatpush1.msra.mxu0 0.0
    %438 = vmatprep.subr.mxu0 0.0
    %439 = vmatpush1.msra.mxu0 0.0
    %440 = vmatprep.subr.mxu0 0.0
    %441 = vmatpush1.msra.mxu0 0.0
    %442 = vmatprep.subr.mxu0 0.0
    %443 = vmatpush1.msra.mxu0 0.0
    %444 = vmatprep.subr.mxu0 0.0
    %445 = vmatpush1.msra.mxu0 0.0
    %446 = vmatprep.subr.mxu0 0.0
    %447 = vmatpush1.msra.mxu0 0.0
    %448 = vmatprep.subr.mxu0 0.0
    %449 = vmatpush1.msra.mxu0 0.0
    %450 = vmatprep.subr.mxu0 0.0
    %451 = vmatpush1.msra.mxu0 0.0
    %452 = vmatprep.subr.mxu0 0.0
    %453 = vmatpush1.msra.mxu0 0.0
    %454 = vmatprep.mubr.f32.mxu0 0.0
    %v455 = vand.u32 %v57, 4294901760
    %456 = vmatmul.mubr.f32.gmra.mrb[0].mxu0 %v455
    %v457 = vpop.f32.mrb[0].mxu0
    %v458 = vadd.f32 %v378, %v457
    %v459 = vpop.f32.mrb[0].mxu0
    %460 = vdwg.mxu0
    %461 = vmatprep.subr.mxu0 0.0
    %v462 = vand.u32 %v52, 4294901760
    %463 = vmatpush1.msra.mxu0 %v462
    %464 = vmatprep.subr.mxu0 0.0
    %v465 = vand.u32 %v53, 4294901760
    %466 = vmatpush1.msra.mxu0 %v465
    %467 = vmatprep.subr.mxu0 0.0
    %v468 = vand.u32 %v61, 4294901760
    %469 = vmatpush1.msra.mxu0 %v468
    %470 = vmatprep.subr.mxu0 0.0
    %471 = vmatpush1.msra.mxu0 0.0
    %472 = vmatprep.subr.mxu0 0.0
    %473 = vmatpush1.msra.mxu0 0.0
    %474 = vmatprep.subr.mxu0 0.0
    %475 = vmatpush1.msra.mxu0 0.0
    %476 = vmatprep.subr.mxu0 0.0
    %477 = vmatpush1.msra.mxu0 0.0
    %478 = vmatprep.subr.mxu0 0.0
    %479 = vmatpush1.msra.mxu0 0.0
    %480 = vmatprep.subr.mxu0 0.0
    %481 = vmatpush1.msra.mxu0 0.0
    %482 = vmatprep.subr.mxu0 0.0
    %483 = vmatpush1.msra.mxu0 0.0
    %484 = vmatprep.subr.mxu0 0.0
    %485 = vmatpush1.msra.mxu0 0.0
    %486 = vmatprep.subr.mxu0 0.0
    %487 = vmatpush1.msra.mxu0 0.0
    %488 = vmatprep.subr.mxu0 0.0
    %489 = vmatpush1.msra.mxu0 0.0
    %490 = vmatprep.subr.mxu0 0.0
    %491 = vmatpush1.msra.mxu0 0.0
    %492 = vmatprep.subr.mxu0 0.0
    %493 = vmatpush1.msra.mxu0 0.0
    %494 = vmatprep.subr.mxu0 0.0
    %495 = vmatpush1.msra.mxu0 0.0
    %496 = vmatprep.subr.mxu0 0.0
    %497 = vmatpush1.msra.mxu0 0.0
    %498 = vmatprep.subr.mxu0 0.0
    %499 = vmatpush1.msra.mxu0 0.0
    %500 = vmatprep.subr.mxu0 0.0
    %501 = vmatpush1.msra.mxu0 0.0
    %502 = vmatprep.subr.mxu0 0.0
    %503 = vmatpush1.msra.mxu0 0.0
    %504 = vmatprep.subr.mxu0 0.0
    %505 = vmatpush1.msra.mxu0 0.0
    %506 = vmatprep.subr.mxu0 0.0
    %507 = vmatpush1.msra.mxu0 0.0
    %508 = vmatprep.subr.mxu0 0.0
    %509 = vmatpush1.msra.mxu0 0.0
    %510 = vmatprep.subr.mxu0 0.0
    %511 = vmatpush1.msra.mxu0 0.0
    %512 = vmatprep.subr.mxu0 0.0
    %513 = vmatpush1.msra.mxu0 0.0
    %514 = vmatprep.subr.mxu0 0.0
    %515 = vmatpush1.msra.mxu0 0.0
    %516 = vmatprep.subr.mxu0 0.0
    %517 = vmatpush1.msra.mxu0 0.0
    %518 = vmatprep.subr.mxu0 0.0
    %519 = vmatpush1.msra.mxu0 0.0
    %520 = vmatprep.subr.mxu0 0.0
    %521 = vmatpush1.msra.mxu0 0.0
    %522 = vmatprep.subr.mxu0 0.0
    %523 = vmatpush1.msra.mxu0 0.0
    %524 = vmatprep.subr.mxu0 0.0
    %525 = vmatpush1.msra.mxu0 0.0
    %526 = vmatprep.subr.mxu0 0.0
    %527 = vmatpush1.msra.mxu0 0.0
    %528 = vmatprep.mubr.f32.mxu0 0.0
    %v529 = vand.u32 %v57, 4294901760
    %530 = vmatmul.mubr.f32.gmra.mrb[0].mxu0 %v529
    %v531 = vpop.f32.mrb[0].mxu0
    %v532 = vadd.f32 %v458, %v531
    %v533 = vpop.f32.mrb[0].mxu0
    %534 = vdwg.mxu0
    %535 = vst [vmem:[#allocation7] sm:$0xff] %v532
    // Predicated region
    $region18: #{tpu_custom_call.1} parent=1 // pred_check
      _
    $region19: #{tpu_custom_call.1} parent=1 // pred_check_branch
      %537 = sbr.rel (0) target = $region21
    $region20: #{tpu_custom_call.1} parent=1 // pred_region
      %s539 = ssub.s32 128, 128
      %540 = vsyncadd [#allocation4], %s539
      %s542 = sshll.u32 [#allocation7], 4
      %s543 = int_to_ptr.vmem [resolvable:$true] %s542
      %545 = dma.vmem_to_hbm [thread:$0]  %s543, 128, %s2, [#allocation4]
    $region21: #{tpu_custom_call.1} parent=1 // pred_fallthru
      _
    // Predicated region
    $region22: #{tpu_custom_call.1} parent=1 // pred_check
      _
    $region23: #{tpu_custom_call.1} parent=1 // pred_check_branch
      %547 = sbr.rel (0) target = $region25
    $region24: #{tpu_custom_call.1} parent=1 // pred_region
      %548 = dma.done [#allocation4], 128
    $region25: #{tpu_custom_call.1} parent=1 // pred_fallthru
      _
    %549 = vsyncpa [#allocation3], 1
    %550 = vsyncpa [#allocation6], 1
    %551 = vsyncpa [#allocation4], 1

</llo_original>
